<compile_context>
chip_gen: v6e
topology: v6e:2x2x1
jax: 0.10.0
libtpu: 0.0.40
codegen_flags: <defaults>
</compile_context>

<pallas_src>
import math
from functools import partial

import numpy as np
import jax
import jax.numpy as jnp
from jax.experimental import pallas as pl
from jax.experimental.pallas import tpu as pltpu  # noqa: F401  (TPU backend)

OUT_LANES = 128          # lane-dense width of every weight block / output row
NEG = -1e30              # "-inf" for padded softmax / log_softmax lanes


def _round8(x):
    return (x + 7) // 8 * 8


def _const_layout(hidden_dim, code_num, output_dim):
    """Row offsets of each parameter block inside the packed constant slab.

    Every block starts at a multiple of 8 rows (sublane-aligned in-kernel slices);
    the slab is OUT_LANES wide so all loads are lane-dense.
    """
    h, c, k = hidden_dim, code_num, output_dim
    r_kt = 0                              # (h, 128)     K^T / sqrt(h), zero-padded lanes
    r_lr = r_kt + _round8(h)              # (h+c, 128)   [[Wl^T,0..],[0,V@Wr^T,V@Wr^T,..]]
    r_wb = r_lr + _round8(h + c)          # (h, 128)     bilinear weight, flattened
    r_sm = r_wb + _round8(h)              # (k*h, 128)   block-sum matrix
    r_bias = r_sm + _round8(k * h)        # 3 bias rows: scores / merged-linear / bilinear
    total = r_bias + 8
    return r_kt, r_lr, r_wb, r_sm, r_bias, total


def pack_attention_module_consts(K, V, Wl, bl, Wr, br, Wb, bb):
    """One-time (init) packing of every parameter into a single f32 slab.

    One slab == one HBM->VMEM DMA inside the kernel. All transposes, the V @ Wr^T
    pre-contraction and the 1/sqrt(H) scale fold happen here, once, off the hot path.
    """
    K = np.asarray(K, np.float64); V = np.asarray(V, np.float64)
    Wl = np.asarray(Wl, np.float64); bl = np.asarray(bl, np.float64)
    Wr = np.asarray(Wr, np.float64); br = np.asarray(br, np.float64)
    Wb = np.asarray(Wb, np.float64); bb = np.asarray(bb, np.float64)

    c, h = K.shape
    kout = Wb.shape[0]
    assert c <= OUT_LANES and kout * h <= OUT_LANES and h + kout * h <= OUT_LANES, (
        "small-shape packing; for larger dims split the slab / tile the grid")

    r_kt, r_lr, r_wb, r_sm, r_bias, total = _const_layout(h, c, kout)
    slab = np.zeros((total, OUT_LANES), np.float64)

    # attention: K pre-transposed, 1/sqrt(h) folded in (zero in-kernel scaling work).
    slab[r_kt:r_kt + h, :c] = K.T / math.sqrt(h)

    # merged left/right projection (one MXU pass, <=128-wide operand -> ok on v5e):
    #   [LN(X) | sel@w] (N, h+c) @ [[Wl^T, 0, 0], [0, V@Wr^T, V@Wr^T]]
    # the right block is replicated `kout` times so the bilinear's "right" operand
    # comes out of the same pass already tiled (no in-kernel jnp.tile/concatenate).
    slab[r_lr:r_lr + h, :h] = Wl.T
    vwr = V @ Wr.T                                               # (c, h) pre-contracted
    for k in range(kout):
        slab[r_lr + h:r_lr + h + c, h + k * h:h + (k + 1) * h] = vwr

    # bilinear weight flattened: t[n, k*h + j] = sum_i left[n, i] * Wb[k, i, j]
    slab[r_wb:r_wb + h, :kout * h] = np.transpose(Wb, (1, 0, 2)).reshape(h, kout * h)

    # block-sum matrix: sums each h-wide chunk of (t * right_rep) -> bilinear logits
    for k in range(kout):
        slab[r_sm + k * h:r_sm + (k + 1) * h, k] = 1.0

    # bias rows (full 128 lanes so padded softmax / log_softmax need no in-kernel pads)
    slab[r_bias + 0, :] = NEG                 # attention score pad lanes -> -inf
    slab[r_bias + 0, :c] = 0.0
    slab[r_bias + 1, :h] = bl                 # [bl | br | br | 0...] for the merged pass
    for k in range(kout):
        slab[r_bias + 1, h + k * h:h + (k + 1) * h] = br
    slab[r_bias + 2, :] = NEG                 # bilinear logit pad lanes -> -inf
    slab[r_bias + 2, :kout] = bb

    return jnp.asarray(slab, jnp.float32)


# ----------------------------------------------------------------------------
# Single fused kernel: attention -> repeat (one-hot matmul) -> LN -> merged
# left/right Linear+ReLU -> Bilinear -> log_softmax.  5 small MXU passes total.
# ----------------------------------------------------------------------------
def _fused_attention_module_kernel(q_ref, x_ref, sel_ref, cs_ref, out_ref, *,
                                   code_num, output_dim):
    h = q_ref.shape[-1]
    n = x_ref.shape[0]
    c, kout = code_num, output_dim
    r_kt, r_lr, r_wb, r_sm, r_bias, _ = _const_layout(h, c, kout)

    # ---- scaled dot-product attention (scale already folded into K^T) ----
    scores = jnp.dot(q_ref[...], cs_ref[r_kt:r_kt + h, :],
                     preferred_element_type=jnp.float32)               # (B, 128)
    scores = scores + cs_ref[r_bias:r_bias + 1, :]                     # pad lanes -> -1e30
    m = jnp.max(scores, axis=-1, keepdims=True)
    e = jnp.exp(scores - m)
    w = e / jnp.sum(e, axis=-1, keepdims=True)                         # exact; pads == 0

    # torch.repeat_interleave(attn, counts, dim=0) as a one-hot matmul on real lanes
    wn = jnp.dot(sel_ref[...], w[:, :c], preferred_element_type=jnp.float32)   # (N, C)

    # ---- LN(): center, unbiased std (ddof=1), eps OUTSIDE the sqrt ----
    x = x_ref[...]
    mu = jnp.mean(x, axis=-1, keepdims=True)
    xc = x - mu
    var = jnp.sum(xc * xc, axis=-1, keepdims=True) * (1.0 / (h - 1))
    xn = xc / (jnp.sqrt(var) + 1e-5)                                   # exact divide

    # ---- merged left/right Linear + ReLU: ONE MXU pass ----
    # input_proj is None (enable_input_proj=False) -> left branch input is LN(X)
    lhs = jnp.concatenate([xn, wn], axis=-1)                           # (N, H + C)
    pre = jnp.dot(lhs, cs_ref[r_lr:r_lr + h + c, :],
                  preferred_element_type=jnp.float32)                  # (N, 128)
    act = jnp.maximum(pre + cs_ref[r_bias + 1:r_bias + 2, :], 0.0)
    left = act[:, :h]                                                  # (N, H)
    right_rep = act[:, h:h + kout * h]                                 # (N, Kout*H) pre-tiled

    # ---- Bilinear: one matmul + one block-sum matmul; logits come out 128-lane padded ----
    t = jnp.dot(left, cs_ref[r_wb:r_wb + h, :kout * h],
                preferred_element_type=jnp.float32)                    # (N, Kout*H)
    logits = jnp.dot(t * right_rep, cs_ref[r_sm:r_sm + kout * h, :],
                     preferred_element_type=jnp.float32)               # (N, 128)
    logits = logits + cs_ref[r_bias + 2:r_bias + 3, :]                 # pad lanes -> -1e30

    # ---- log_softmax over the lane-dense (padded) class axis ----
    mm = jnp.max(logits, axis=-1, keepdims=True)
    lse = jnp.log(jnp.sum(jnp.exp(logits - mm), axis=-1, keepdims=True))

    # ---- single lane-dense output slab: rows [0:N) log-probs, rows [N:N+B) attn weights ----
    out_ref[0:n, :] = logits - mm - lse
    out_ref[n:, :] = w


# ----------------------------------------------------------------------------
# jit'd per-call wrapper (zero un-jitted device work in the hot path)
# ----------------------------------------------------------------------------
@partial(jax.jit, static_argnames=("code_num", "output_dim"))
def _fused_forward(context_vec, X, sel, const_slab, *, code_num, output_dim):
    b = context_vec.shape[0]
    n = X.shape[0]
    kernel = partial(_fused_attention_module_kernel,
                     code_num=code_num, output_dim=output_dim)
    out = pl.pallas_call(
        kernel,
        out_shape=jax.ShapeDtypeStruct((n + b, OUT_LANES), jnp.float32),
    )(context_vec, X, sel, const_slab)
    log_probs = out[:n, :output_dim]
    attn_weights = out[n:, :code_num]
    return log_probs, attn_weights


class AttentionModuleTPU:
    """Pallas port of AttentionModule(enable_input_proj=False, ln=True)."""

    def __init__(self, K, V, Wl, bl, Wr, br, Wb, bb):
        self.code_num, self.hidden_dim = np.asarray(K).shape
        self.output_dim = np.asarray(Wb).shape[0]
        self.const = pack_attention_module_consts(K, V, Wl, bl, Wr, br, Wb, bb)
        self._sel_cache = {}

    def _selector(self, repeat_counts, batch):
        key = (tuple(int(r) for r in repeat_counts), batch)
        sel = self._sel_cache.get(key)
        if sel is None:
            idx = np.repeat(np.arange(batch), key[0])
            mat = np.zeros((idx.size, batch), np.float32)
            mat[np.arange(idx.size), idx] = 1.0
            sel = jnp.asarray(mat)
            self._sel_cache[key] = sel
        return sel

    def __call__(self, context_vec, X, repeat_counts=None):
        b = context_vec.shape[0]
        if repeat_counts is None:
            repeat_counts = [X.shape[0]]           # matches the torch default path
        assert int(np.sum(repeat_counts)) == X.shape[0]
        sel = self._selector(repeat_counts, b)
        return _fused_forward(context_vec, X, sel, self.const,
                              code_num=self.code_num, output_dim=self.output_dim)


# ----------------------------------------------------------------------------
# float64 numpy ground truth (mirrors the PyTorch forward exactly)
# ----------------------------------------------------------------------------
def reference_forward(context_vec, X, K, V, Wl, bl, Wr, br, Wb, bb, repeat_counts):
    cv = np.asarray(context_vec, np.float64); X = np.asarray(X, np.float64)
    K = np.asarray(K, np.float64); V = np.asarray(V, np.float64)
    Wl = np.asarray(Wl, np.float64); bl = np.asarray(bl, np.float64)
    Wr = np.asarray(Wr, np.float64); br = np.asarray(br, np.float64)
    Wb = np.asarray(Wb, np.float64); bb = np.asarray(bb, np.float64)
    h = cv.shape[-1]
    scores = cv @ K.T / np.sqrt(h)
    e = np.exp(scores - scores.max(-1, keepdims=True))
    w = e / e.sum(-1, keepdims=True)
    attn = w @ V
    mu = X.mean(-1, keepdims=True)
    xc = X - mu
    std = np.sqrt((xc ** 2).sum(-1, keepdims=True) / (X.shape[-1] - 1))
    xn = xc / (std + 1e-5)
    idx = np.repeat(np.arange(len(repeat_counts)), repeat_counts)
    a = attn[idx]
    left = np.maximum(xn @ Wl.T + bl, 0.0)
    right = np.maximum(a @ Wr.T + br, 0.0)
    logits = np.einsum('ni,kij,nj->nk', left, Wb, right) + bb
    mmax = logits.max(-1, keepdims=True)
    lse = np.log(np.exp(logits - mmax).sum(-1, keepdims=True))
    return logits - mmax - lse, w


if __name__ == "__main__":
    # Small shapes consistent with the module
    code_num, hidden_dim, output_dim = 16, 32, 2
    B = 2                      # number of context vectors
    repeat_counts = [3, 5]     # rows of X per context vector
    N = sum(repeat_counts)     # = 8 rows of X

    key = jax.random.PRNGKey(0)
    ks = jax.random.split(key, 10)
    context_vec = jax.random.normal(ks[0], (B, hidden_dim), jnp.float32)
    X = jax.random.normal(ks[1], (N, hidden_dim), jnp.float32)
    K_buf = jax.random.normal(ks[2], (code_num, hidden_dim), jnp.float32)        # buffer K
    V = jax.random.normal(ks[3], (code_num, hidden_dim), jnp.float32)            # Parameter V
    Wl = 0.1 * jax.random.normal(ks[4], (hidden_dim, hidden_dim), jnp.float32)   # left_proj
    bl = 0.1 * jax.random.normal(ks[5], (hidden_dim,), jnp.float32)
    Wr = 0.1 * jax.random.normal(ks[6], (hidden_dim, hidden_dim), jnp.float32)   # right_proj
    br = 0.1 * jax.random.normal(ks[7], (hidden_dim,), jnp.float32)
    Wb = 0.1 * jax.random.normal(ks[8], (output_dim, hidden_dim, hidden_dim),
                                 jnp.float32)                                    # Bilinear W
    bb = 0.1 * jax.random.normal(ks[9], (output_dim,), jnp.float32)              # Bilinear b

    module = AttentionModuleTPU(K_buf, V, Wl, bl, Wr, br, Wb, bb)
    log_probs, attn_weights = module(context_vec, X, repeat_counts)
    jax.block_until_ready((log_probs, attn_weights))

    ref_lp, ref_w = reference_forward(
        context_vec, X, K_buf, V, Wl, bl, Wr, br, Wb, bb, repeat_counts)
    # Exact reciprocals/divides in-kernel and exact 0/1 selection / block-sum matrices:
    # tolerances restored to tight values (all kernel math is f32).
    assert np.allclose(np.asarray(log_probs), ref_lp, atol=1e-3, rtol=1e-3)
    assert np.allclose(np.asarray(attn_weights), ref_w, atol=1e-3, rtol=1e-3)

    print("KERNEL_OK")
</pallas_src>

<mosaic_0001>
module attributes {stable_mosaic.version = 11 : i64} {
  func.func @_fused_attention_module_kernel(%arg0: memref<2x32xf32, #tpu.memory_space<vmem>>, %arg1: memref<8x32xf32, #tpu.memory_space<vmem>>, %arg2: memref<8x2xf32, #tpu.memory_space<vmem>>, %arg3: memref<184x128xf32, #tpu.memory_space<vmem>>, %arg4: memref<10x128xf32, #tpu.memory_space<vmem>>) attributes {dimension_semantics = [], scalar_prefetch = 0 : i64, scratch_operands = 0 : i64, tpu.core_type = #tpu.core_type<tc>} {
    %c0 = arith.constant 0 : index
    %c0_0 = arith.constant 0 : index
    %0 = vector.load %arg0[%c0, %c0_0] : memref<2x32xf32, #tpu.memory_space<vmem>>, vector<2x32xf32>
    %c0_1 = arith.constant 0 : index
    %c0_2 = arith.constant 0 : index
    %1 = vector.load %arg3[%c0_1, %c0_2] : memref<184x128xf32, #tpu.memory_space<vmem>>, vector<32x128xf32>
    %cst = arith.constant dense<0.000000e+00> : vector<2x128xf32>
    %2 = tpu.matmul %0, %1, %cst {dimension_numbers = #tpu.dot_dimension_numbers<[1], [0], [0], [1], [0, 0, 1, 1], [], []>} : vector<2x32xf32>, vector<32x128xf32>, vector<2x128xf32> -> vector<2x128xf32>
    %c176 = arith.constant 176 : index
    %c0_3 = arith.constant 0 : index
    %3 = vector.load %arg3[%c176, %c0_3] : memref<184x128xf32, #tpu.memory_space<vmem>>, vector<1x128xf32>
    %4 = vector.broadcast %3 : vector<1x128xf32> to vector<2x128xf32>
    %5 = arith.addf %2, %4 : vector<2x128xf32>
    %cst_4 = arith.constant dense<0xFF800000> : vector<2xf32>
    %6 = vector.multi_reduction <maximumf>, %5, %cst_4 [1] : vector<2x128xf32> to vector<2xf32>
    %7 = vector.shape_cast %6 : vector<2xf32> to vector<2x1xf32>
    %8 = vector.broadcast %7 : vector<2x1xf32> to vector<2x128xf32>
    %9 = arith.subf %5, %8 : vector<2x128xf32>
    %10 = math.exp %9 : vector<2x128xf32>
    %cst_5 = arith.constant dense<0.000000e+00> : vector<2xf32>
    %11 = vector.multi_reduction <add>, %10, %cst_5 [1] : vector<2x128xf32> to vector<2xf32>
    %12 = vector.shape_cast %11 : vector<2xf32> to vector<2x1xf32>
    %13 = vector.broadcast %12 : vector<2x1xf32> to vector<2x128xf32>
    %14 = arith.divf %10, %13 : vector<2x128xf32>
    %c0_6 = arith.constant 0 : index
    %c0_7 = arith.constant 0 : index
    %15 = vector.load %arg2[%c0_6, %c0_7] : memref<8x2xf32, #tpu.memory_space<vmem>>, vector<8x2xf32>
    %16 = vector.extract_strided_slice %14 {offsets = [0, 0], sizes = [2, 16], strides = [1, 1]} : vector<2x128xf32> to vector<2x16xf32>
    %cst_8 = arith.constant dense<0.000000e+00> : vector<8x16xf32>
    %17 = tpu.matmul %15, %16, %cst_8 {dimension_numbers = #tpu.dot_dimension_numbers<[1], [0], [0], [1], [0, 0, 1, 1], [], []>} : vector<8x2xf32>, vector<2x16xf32>, vector<8x16xf32> -> vector<8x16xf32>
    %c0_9 = arith.constant 0 : index
    %c0_10 = arith.constant 0 : index
    %18 = vector.load %arg1[%c0_9, %c0_10] : memref<8x32xf32, #tpu.memory_space<vmem>>, vector<8x32xf32>
    %cst_11 = arith.constant dense<0.000000e+00> : vector<8xf32>
    %19 = vector.multi_reduction <add>, %18, %cst_11 [1] : vector<8x32xf32> to vector<8xf32>
    %20 = vector.shape_cast %19 : vector<8xf32> to vector<8x1xf32>
    %cst_12 = arith.constant 3.200000e+01 : f32
    %21 = vector.broadcast %cst_12 : f32 to vector<8x1xf32>
    %22 = arith.divf %20, %21 : vector<8x1xf32>
    %23 = vector.broadcast %22 : vector<8x1xf32> to vector<8x32xf32>
    %24 = arith.subf %18, %23 : vector<8x32xf32>
    %25 = arith.mulf %24, %24 : vector<8x32xf32>
    %cst_13 = arith.constant dense<0.000000e+00> : vector<8xf32>
    %26 = vector.multi_reduction <add>, %25, %cst_13 [1] : vector<8x32xf32> to vector<8xf32>
    %27 = vector.shape_cast %26 : vector<8xf32> to vector<8x1xf32>
    %cst_14 = arith.constant 0.0322580636 : f32
    %28 = vector.broadcast %cst_14 : f32 to vector<8x1xf32>
    %29 = arith.mulf %27, %28 : vector<8x1xf32>
    %30 = math.sqrt %29 : vector<8x1xf32>
    %cst_15 = arith.constant 9.99999974E-6 : f32
    %31 = vector.broadcast %cst_15 : f32 to vector<8x1xf32>
    %32 = arith.addf %30, %31 : vector<8x1xf32>
    %33 = vector.broadcast %32 : vector<8x1xf32> to vector<8x32xf32>
    %34 = arith.divf %24, %33 : vector<8x32xf32>
    %35 = tpu.concatenate %34, %17 in 1 : vector<8x32xf32>, vector<8x16xf32> -> vector<8x48xf32>
    %c32 = arith.constant 32 : index
    %c0_16 = arith.constant 0 : index
    %36 = vector.load %arg3[%c32, %c0_16] : memref<184x128xf32, #tpu.memory_space<vmem>>, vector<48x128xf32>
    %cst_17 = arith.constant dense<0.000000e+00> : vector<8x128xf32>
    %37 = tpu.matmul %35, %36, %cst_17 {dimension_numbers = #tpu.dot_dimension_numbers<[1], [0], [0], [1], [0, 0, 1, 1], [], []>} : vector<8x48xf32>, vector<48x128xf32>, vector<8x128xf32> -> vector<8x128xf32>
    %c177 = arith.constant 177 : index
    %c0_18 = arith.constant 0 : index
    %38 = vector.load %arg3[%c177, %c0_18] : memref<184x128xf32, #tpu.memory_space<vmem>>, vector<1x128xf32>
    %39 = vector.broadcast %38 : vector<1x128xf32> to vector<8x128xf32>
    %40 = arith.addf %37, %39 : vector<8x128xf32>
    %cst_19 = arith.constant 0.000000e+00 : f32
    %41 = vector.broadcast %cst_19 : f32 to vector<8x128xf32>
    %42 = arith.maximumf %40, %41 : vector<8x128xf32>
    %43 = vector.extract_strided_slice %42 {offsets = [0, 0], sizes = [8, 32], strides = [1, 1]} : vector<8x128xf32> to vector<8x32xf32>
    %44 = vector.extract_strided_slice %42 {offsets = [0, 32], sizes = [8, 64], strides = [1, 1]} : vector<8x128xf32> to vector<8x64xf32>
    %c80 = arith.constant 80 : index
    %c0_20 = arith.constant 0 : index
    %45 = vector.load %arg3[%c80, %c0_20] : memref<184x128xf32, #tpu.memory_space<vmem>>, vector<32x64xf32>
    %cst_21 = arith.constant dense<0.000000e+00> : vector<8x64xf32>
    %46 = tpu.matmul %43, %45, %cst_21 {dimension_numbers = #tpu.dot_dimension_numbers<[1], [0], [0], [1], [0, 0, 1, 1], [], []>} : vector<8x32xf32>, vector<32x64xf32>, vector<8x64xf32> -> vector<8x64xf32>
    %47 = arith.mulf %46, %44 : vector<8x64xf32>
    %c112 = arith.constant 112 : index
    %c0_22 = arith.constant 0 : index
    %48 = vector.load %arg3[%c112, %c0_22] : memref<184x128xf32, #tpu.memory_space<vmem>>, vector<64x128xf32>
    %cst_23 = arith.constant dense<0.000000e+00> : vector<8x128xf32>
    %49 = tpu.matmul %47, %48, %cst_23 {dimension_numbers = #tpu.dot_dimension_numbers<[1], [0], [0], [1], [0, 0, 1, 1], [], []>} : vector<8x64xf32>, vector<64x128xf32>, vector<8x128xf32> -> vector<8x128xf32>
    %c178 = arith.constant 178 : index
    %c0_24 = arith.constant 0 : index
    %50 = vector.load %arg3[%c178, %c0_24] : memref<184x128xf32, #tpu.memory_space<vmem>>, vector<1x128xf32>
    %51 = vector.broadcast %50 : vector<1x128xf32> to vector<8x128xf32>
    %52 = arith.addf %49, %51 : vector<8x128xf32>
    %cst_25 = arith.constant dense<0xFF800000> : vector<8xf32>
    %53 = vector.multi_reduction <maximumf>, %52, %cst_25 [1] : vector<8x128xf32> to vector<8xf32>
    %54 = vector.shape_cast %53 : vector<8xf32> to vector<8x1xf32>
    %55 = vector.broadcast %54 : vector<8x1xf32> to vector<8x128xf32>
    %56 = arith.subf %52, %55 : vector<8x128xf32>
    %57 = math.exp %56 : vector<8x128xf32>
    %cst_26 = arith.constant dense<0.000000e+00> : vector<8xf32>
    %58 = vector.multi_reduction <add>, %57, %cst_26 [1] : vector<8x128xf32> to vector<8xf32>
    %59 = vector.shape_cast %58 : vector<8xf32> to vector<8x1xf32>
    %60 = math.log %59 : vector<8x1xf32>
    %61 = vector.broadcast %54 : vector<8x1xf32> to vector<8x128xf32>
    %62 = arith.subf %52, %61 : vector<8x128xf32>
    %63 = vector.broadcast %60 : vector<8x1xf32> to vector<8x128xf32>
    %64 = arith.subf %62, %63 : vector<8x128xf32>
    %c0_27 = arith.constant 0 : index
    %c0_28 = arith.constant 0 : index
    %65 = vector.load %arg4[%c0_27, %c0_28] : memref<10x128xf32, #tpu.memory_space<vmem>>, vector<8x128xf32>
    tpu.vector_store %arg4[%c0_27, %c0_28], %64 {strides = array<i32>} : memref<10x128xf32, #tpu.memory_space<vmem>>, vector<8x128xf32>,
    %c8 = arith.constant 8 : index
    %c0_29 = arith.constant 0 : index
    %66 = vector.load %arg4[%c8, %c0_29] : memref<10x128xf32, #tpu.memory_space<vmem>>, vector<2x128xf32>
    tpu.vector_store %arg4[%c8, %c0_29], %14 {strides = array<i32>} : memref<10x128xf32, #tpu.memory_space<vmem>>, vector<2x128xf32>,
    return
  }
}

</mosaic_0001>

<llo_original>
// kernel: _fused_forward.1
$region0: #{_fused_forward.1}
  #allocation0 [shape = 'u32[]', space=smem, size = 0x4, offset = 0x4, fixed_abs, tag = 'smem constant byte address 0x4 - core index']
  #allocation1 [shape = 'u32[144,128]{1,0:T(1,128)}', space=vmem, size = 0x12000, scoped, tag = 'internal scratch']
  %s0 = inlined_call_operand.vmem [shape: f32[2,32], index: 0, kind: input, shape index: {}]
  %s1 = inlined_call_operand.vmem [shape: f32[8,32], index: 1, kind: input, shape index: {}]
  %s2 = inlined_call_operand.vmem [shape: f32[8,2], index: 2, kind: input, shape index: {}]
  %s3 = inlined_call_operand.hbm [shape: f32[184,128], index: 3, kind: input, shape index: {}]
  %s4 = inlined_call_operand.vmem [shape: f32[10,128], index: 4, kind: output, shape index: {}]
  %s5 = sld [smem:[#allocation0]]
  $region30: #{_fused_forward.1} parent=0
    _
  %s7 = ssub.s32 1, %s5
  %s8 = scalar_select 0, %s7, %s5
  $region1: #{_fused_forward.1} parent=0
    #allocation2 [shape = 'u8[94208]{0}', space=vmem, size = 0x17000, scoped, tag = 'input window, operand 3, single buffered']
    #allocation3 [shape = 's32[1]{0}', space=sflag, size = 0x4, scoped, tag = 'scoped memory for _fused_forward.1']
    %9 = vsyncpa [#allocation3], 0
    // Predicated region
    $region2: #{_fused_forward.1} parent=1 // pred_check
      _
    $region3: #{_fused_forward.1} parent=1 // pred_check_branch
      %11 = sbr.rel (0) target = $region5
    $region4: #{_fused_forward.1} parent=1 // pred_region
      _
    $region5: #{_fused_forward.1} parent=1 // pred_fallthru
      _
    // Predicated region
    $region6: #{_fused_forward.1} parent=1 // pred_check
      _
    $region7: #{_fused_forward.1} parent=1 // pred_check_branch
      %13 = sbr.rel (0) target = $region9
    $region8: #{_fused_forward.1} parent=1 // pred_region
      _
    $region9: #{_fused_forward.1} parent=1 // pred_fallthru
      _
    // Predicated region
    $region10: #{_fused_forward.1} parent=1 // pred_check
      _
    $region11: #{_fused_forward.1} parent=1 // pred_check_branch
      %15 = sbr.rel (0) target = $region13
    $region12: #{_fused_forward.1} parent=1 // pred_region
      _
    $region13: #{_fused_forward.1} parent=1 // pred_fallthru
      _
    // Predicated region
    $region14: #{_fused_forward.1} parent=1 // pred_check
      _
    $region15: #{_fused_forward.1} parent=1 // pred_check_branch
      %17 = sbr.rel (0) target = $region17
    $region16: #{_fused_forward.1} parent=1 // pred_region
      %s19 = ssub.s32 2944, 2944
      %20 = vsyncadd [#allocation3], %s19
      %s21 = sshll.u32 [#allocation2], 4
      %s22 = int_to_ptr.vmem [resolvable:$true] %s21
      %27 = dma.hbm_to_vmem [thread:$0]  %s3, 2944, %s22, [#allocation3], 128, 128, 8
    $region17: #{_fused_forward.1} parent=1 // pred_fallthru
      _
    // Predicated region
    $region18: #{_fused_forward.1} parent=1 // pred_check
      _
    $region19: #{_fused_forward.1} parent=1 // pred_check_branch
      %29 = sbr.rel (0) target = $region21
    $region20: #{_fused_forward.1} parent=1 // pred_region
      %30 = dma.done [#allocation3], 2944
    $region21: #{_fused_forward.1} parent=1 // pred_fallthru
      _
    %v31 = vld [vmem:[%s0] sm:$0x3]
    %v32 = vld [vmem:[#allocation2] sm:$0xff]
    %v33 = vld [vmem:[#allocation2 + $0x8] sm:$0xff]
    %v34 = vld [vmem:[#allocation2 + $0x10] sm:$0xff]
    %v35 = vld [vmem:[#allocation2 + $0x18] sm:$0xff]
    %v36 = vld [vmem:[#allocation2 + $0xb0] sm:$0x1]
    %v37 = vlaneseq
    %v38 = vshrl.u32 %v37, 7
    %v39 = vsub.s32 0, %v38
    %v40 = vrot.slane %v36, %v39
    %vm41 = vcmask 261120
    %v43 = vsel %vm41, %v31, 0
    %45 = vmatprep.subr.mxu0 0.0
    %46 = vmatpush1.msra.mxu0 0.0
    %47 = vmatprep.subr.mxu0 0.0
    %48 = vmatpush1.msra.mxu0 0.0
    %49 = vmatprep.subr.mxu0 0.0
    %50 = vmatpush1.msra.mxu0 0.0
    %51 = vmatprep.subr.mxu0 0.0
    %52 = vmatpush1.msra.mxu0 0.0
    %53 = vmatprep.subr.mxu0 0.0
    %54 = vmatpush1.msra.mxu0 0.0
    %55 = vmatprep.subr.mxu0 0.0
    %56 = vmatpush1.msra.mxu0 0.0
    %57 = vmatprep.subr.mxu0 0.0
    %58 = vmatpush1.msra.mxu0 0.0
    %59 = vmatprep.subr.mxu0 0.0
    %60 = vmatpush1.msra.mxu0 0.0
    %61 = vmatprep.subr.mxu0 0.0
    %62 = vmatpush1.msra.mxu0 0.0
    %63 = vmatprep.subr.mxu0 0.0
    %64 = vmatpush1.msra.mxu0 0.0
    %65 = vmatprep.subr.mxu0 0.0
    %66 = vmatpush1.msra.mxu0 0.0
    %67 = vmatprep.subr.mxu0 0.0
    %68 = vmatpush1.msra.mxu0 0.0
    %69 = vmatprep.subr.mxu0 0.0
    %70 = vmatpush1.msra.mxu0 %v35
    %71 = vmatprep.subr.mxu0 0.0
    %72 = vmatpush1.msra.mxu0 %v34
    %73 = vmatprep.subr.mxu0 0.0
    %74 = vmatpush1.msra.mxu0 %v33
    %75 = vmatprep.subr.mxu0 0.0
    %76 = vmatpush1.msra.mxu0 %v32
    %77 = vmatprep.subr.mxu0 0.0
    %78 = vmatpush2.msra.mxu0 0.0
    %79 = vmatprep.subr.mxu0 0.0
    %80 = vmatpush2.msra.mxu0 0.0
    %81 = vmatprep.subr.mxu0 0.0
    %82 = vmatpush2.msra.mxu0 0.0
    %83 = vmatprep.subr.mxu0 0.0
    %84 = vmatpush2.msra.mxu0 0.0
    %85 = vmatprep.subr.mxu0 0.0
    %86 = vmatpush2.msra.mxu0 0.0
    %87 = vmatprep.subr.mxu0 0.0
    %88 = vmatpush2.msra.mxu0 0.0
    %89 = vmatprep.subr.mxu0 0.0
    %90 = vmatpush2.msra.mxu0 0.0
    %91 = vmatprep.subr.mxu0 0.0
    %92 = vmatpush2.msra.mxu0 0.0
    %93 = vmatprep.subr.mxu0 0.0
    %94 = vmatpush2.msra.mxu0 0.0
    %95 = vmatprep.subr.mxu0 0.0
    %96 = vmatpush2.msra.mxu0 0.0
    %97 = vmatprep.subr.mxu0 0.0
    %98 = vmatpush2.msra.mxu0 0.0
    %99 = vmatprep.subr.mxu0 0.0
    %100 = vmatpush2.msra.mxu0 0.0
    %101 = vmatprep.subr.mxu0 0.0
    %102 = vmatpush2.msra.mxu0 0.0
    %103 = vmatprep.subr.mxu0 0.0
    %104 = vmatpush2.msra.mxu0 0.0
    %105 = vmatprep.subr.mxu0 0.0
    %106 = vmatpush2.msra.mxu0 0.0
    %107 = vmatprep.subr.mxu0 0.0
    %108 = vmatpush2.msra.mxu0 0.0
    %109 = vmatprep.mubr.f32.mxu0 0.0
    %110 = vmatmul.mubr.f32.gmra.mxu0 %v43
    %v111 = vpop.f32.mrf.mxu0
    %v112 = vadd.f32 %v40, %v111
    %v113 = vpop.f32.mrf.mxu0
    %114 = vdwg.mxu0
    %vm115 = vcmask 1041408
    %v116 = vsel %vm115, %v112, -inf
    %117 = vmax.xlane.f32.xlu0 %v116
    %v118 = vpop.xlane.xlu0 %117
    %v119 = vsub.f32 %v112, %v118
    %v120 = vmul.f32 %v119, 1.442695
    %v121 = vpow.pop %v120
    %v122 = vsel %vm115, %v121, 0.0
    %123 = vadd.xlane.f32.xlu0 %v122
    %v124 = vpop.xlane.xlu0 %123
    %v125 = vrcp.pop %v124
    %v126 = vmul.f32 %v121, %v125
    %v127 = vld [vmem:[%s2] sm:$0xff]
    %vm128 = vcmask 15360
    %v130 = vsel %vm128, %v127, 0
    %v133 = vsel %vm115, %v126, 0
    %135 = vmatprep.subr.mxu0 0.0
    %136 = vmatpush1.msra.mxu0 0.0
    %137 = vmatprep.subr.mxu0 0.0
    %138 = vmatpush1.msra.mxu0 0.0
    %139 = vmatprep.subr.mxu0 0.0
    %140 = vmatpush1.msra.mxu0 0.0
    %141 = vmatprep.subr.mxu0 0.0
    %142 = vmatpush1.msra.mxu0 0.0
    %143 = vmatprep.subr.mxu0 0.0
    %144 = vmatpush1.msra.mxu0 0.0
    %145 = vmatprep.subr.mxu0 0.0
    %146 = vmatpush1.msra.mxu0 0.0
    %147 = vmatprep.subr.mxu0 0.0
    %148 = vmatpush1.msra.mxu0 0.0
    %149 = vmatprep.subr.mxu0 0.0
    %150 = vmatpush1.msra.mxu0 0.0
    %151 = vmatprep.subr.mxu0 0.0
    %152 = vmatpush1.msra.mxu0 0.0
    %153 = vmatprep.subr.mxu0 0.0
    %154 = vmatpush1.msra.mxu0 0.0
    %155 = vmatprep.subr.mxu0 0.0
    %156 = vmatpush1.msra.mxu0 0.0
    %157 = vmatprep.subr.mxu0 0.0
    %158 = vmatpush1.msra.mxu0 0.0
    %159 = vmatprep.subr.mxu0 0.0
    %160 = vmatpush1.msra.mxu0 0.0
    %161 = vmatprep.subr.mxu0 0.0
    %162 = vmatpush1.msra.mxu0 0.0
    %163 = vmatprep.subr.mxu0 0.0
    %164 = vmatpush1.msra.mxu0 0.0
    %165 = vmatprep.subr.mxu0 0.0
    %166 = vmatpush1.msra.mxu0 %v133
    %167 = vmatprep.subr.mxu0 0.0
    %168 = vmatpush2.msra.mxu0 0.0
    %169 = vmatprep.subr.mxu0 0.0
    %170 = vmatpush2.msra.mxu0 0.0
    %171 = vmatprep.subr.mxu0 0.0
    %172 = vmatpush2.msra.mxu0 0.0
    %173 = vmatprep.subr.mxu0 0.0
    %174 = vmatpush2.msra.mxu0 0.0
    %175 = vmatprep.subr.mxu0 0.0
    %176 = vmatpush2.msra.mxu0 0.0
    %177 = vmatprep.subr.mxu0 0.0
    %178 = vmatpush2.msra.mxu0 0.0
    %179 = vmatprep.subr.mxu0 0.0
    %180 = vmatpush2.msra.mxu0 0.0
    %181 = vmatprep.subr.mxu0 0.0
    %182 = vmatpush2.msra.mxu0 0.0
    %183 = vmatprep.subr.mxu0 0.0
    %184 = vmatpush2.msra.mxu0 0.0
    %185 = vmatprep.subr.mxu0 0.0
    %186 = vmatpush2.msra.mxu0 0.0
    %187 = vmatprep.subr.mxu0 0.0
    %188 = vmatpush2.msra.mxu0 0.0
    %189 = vmatprep.subr.mxu0 0.0
    %190 = vmatpush2.msra.mxu0 0.0
    %191 = vmatprep.subr.mxu0 0.0
    %192 = vmatpush2.msra.mxu0 0.0
    %193 = vmatprep.subr.mxu0 0.0
    %194 = vmatpush2.msra.mxu0 0.0
    %195 = vmatprep.subr.mxu0 0.0
    %196 = vmatpush2.msra.mxu0 0.0
    %197 = vmatprep.subr.mxu0 0.0
    %198 = vmatpush2.msra.mxu0 0.0
    %199 = vmatprep.mubr.f32.mxu0 0.0
    %200 = vmatmul.mubr.f32.gmra.mxu0 %v130
    %v201 = vpop.f32.mrf.mxu0
    %v202 = vadd.f32 0.0, %v201
    %v203 = vpop.f32.mrf.mxu0
    %204 = vdwg.mxu0
    %v205 = vld [vmem:[%s1] sm:$0xff]
    %v206 = vsel %vm41, %v205, 0.0
    %207 = vadd.xlane.f32.xlu0 %v206
    %v208 = vpop.xlane.xlu0 %207
    %v209 = vrcp.pop 32.0
    %v210 = vmul.f32 %v208, %v209
    %v211 = vsub.f32 %v205, %v210
    %v212 = vmul.f32 %v211, %v211
    %v213 = vsel %vm41, %v212, 0.0
    %214 = vadd.xlane.f32.xlu0 %v213
    %v215 = vpop.xlane.xlu0 %214
    %v216 = vmul.f32 %v215, 0.032258064
    %v217 = vrsqrt.pop %v216
    %v218 = vmul.f32 %v216, %v217
    %vm219 = vcmp.eq.f32.partialorder %v216, inf
    %v220 = vsel %vm219, %v216, %v218
    %vm221 = vcmp.eq.f32.partialorder %v216, 0.0
    %v222 = vand.u32 %v216, 2147483648
    %v223 = vsel %vm221, %v222, %v220
    %v224 = vadd.f32 %v223, 1e-05
    %v225 = vrcp.pop %v224
    %v226 = vmul.f32 %v211, %v225
    %228 = vrot.lane.b32.xlu0 %v202, 32
    %v229 = vpop.permute.xlu0 %228
    %v231 = vsel %vm41, %v226, %v229
    %v232 = vld [vmem:[#allocation2 + $0x20] sm:$0xff]
    %v233 = vld [vmem:[#allocation2 + $0x28] sm:$0xff]
    %v234 = vld [vmem:[#allocation2 + $0x30] sm:$0xff]
    %v235 = vld [vmem:[#allocation2 + $0x38] sm:$0xff]
    %v236 = vld [vmem:[#allocation2 + $0x40] sm:$0xff]
    %v237 = vld [vmem:[#allocation2 + $0x48] sm:$0xff]
    %v238 = vld [vmem:[#allocation2 + $0xb1] sm:$0x1]
    %v239 = vlaneseq
    %v240 = vshrl.u32 %v239, 7
    %v241 = vsub.s32 0, %v240
    %v242 = vrot.slane %v238, %v241
    %vm243 = vcmask 392192
    %v245 = vsel %vm243, %v231, 0
    %247 = vmatprep.subr.mxu0 0.0
    %248 = vmatpush1.msra.mxu0 0.0
    %249 = vmatprep.subr.mxu0 0.0
    %250 = vmatpush1.msra.mxu0 0.0
    %251 = vmatprep.subr.mxu0 0.0
    %252 = vmatpush1.msra.mxu0 0.0
    %253 = vmatprep.subr.mxu0 0.0
    %254 = vmatpush1.msra.mxu0 0.0
    %255 = vmatprep.subr.mxu0 0.0
    %256 = vmatpush1.msra.mxu0 0.0
    %257 = vmatprep.subr.mxu0 0.0
    %258 = vmatpush1.msra.mxu0 0.0
    %259 = vmatprep.subr.mxu0 0.0
    %260 = vmatpush1.msra.mxu0 0.0
    %261 = vmatprep.subr.mxu0 0.0
    %262 = vmatpush1.msra.mxu0 0.0
    %263 = vmatprep.subr.mxu0 0.0
    %264 = vmatpush1.msra.mxu0 0.0
    %265 = vmatprep.subr.mxu0 0.0
    %266 = vmatpush1.msra.mxu0 0.0
    %267 = vmatprep.subr.mxu0 0.0
    %268 = vmatpush1.msra.mxu0 %v237
    %269 = vmatprep.subr.mxu0 0.0
    %270 = vmatpush1.msra.mxu0 %v236
    %271 = vmatprep.subr.mxu0 0.0
    %272 = vmatpush1.msra.mxu0 %v235
    %273 = vmatprep.subr.mxu0 0.0
    %274 = vmatpush1.msra.mxu0 %v234
    %275 = vmatprep.subr.mxu0 0.0
    %276 = vmatpush1.msra.mxu0 %v233
    %277 = vmatprep.subr.mxu0 0.0
    %278 = vmatpush1.msra.mxu0 %v232
    %279 = vmatprep.subr.mxu0 0.0
    %280 = vmatpush2.msra.mxu0 0.0
    %281 = vmatprep.subr.mxu0 0.0
    %282 = vmatpush2.msra.mxu0 0.0
    %283 = vmatprep.subr.mxu0 0.0
    %284 = vmatpush2.msra.mxu0 0.0
    %285 = vmatprep.subr.mxu0 0.0
    %286 = vmatpush2.msra.mxu0 0.0
    %287 = vmatprep.subr.mxu0 0.0
    %288 = vmatpush2.msra.mxu0 0.0
    %289 = vmatprep.subr.mxu0 0.0
    %290 = vmatpush2.msra.mxu0 0.0
    %291 = vmatprep.subr.mxu0 0.0
    %292 = vmatpush2.msra.mxu0 0.0
    %293 = vmatprep.subr.mxu0 0.0
    %294 = vmatpush2.msra.mxu0 0.0
    %295 = vmatprep.subr.mxu0 0.0
    %296 = vmatpush2.msra.mxu0 0.0
    %297 = vmatprep.subr.mxu0 0.0
    %298 = vmatpush2.msra.mxu0 0.0
    %299 = vmatprep.subr.mxu0 0.0
    %300 = vmatpush2.msra.mxu0 0.0
    %301 = vmatprep.subr.mxu0 0.0
    %302 = vmatpush2.msra.mxu0 0.0
    %303 = vmatprep.subr.mxu0 0.0
    %304 = vmatpush2.msra.mxu0 0.0
    %305 = vmatprep.subr.mxu0 0.0
    %306 = vmatpush2.msra.mxu0 0.0
    %307 = vmatprep.subr.mxu0 0.0
    %308 = vmatpush2.msra.mxu0 0.0
    %309 = vmatprep.subr.mxu0 0.0
    %310 = vmatpush2.msra.mxu0 0.0
    %311 = vmatprep.mubr.f32.mxu0 0.0
    %312 = vmatmul.mubr.f32.gmra.mxu0 %v245
    %v313 = vpop.f32.mrf.mxu0
    %v314 = vadd.f32 %v242, %v313
    %v315 = vpop.f32.mrf.mxu0
    %316 = vdwg.mxu0
    %v317 = vmax.f32 %v314, 0.0
    %v318 = vld [vmem:[#allocation2 + $0x50] sm:$0xff]
    %v319 = vld [vmem:[#allocation2 + $0x58] sm:$0xff]
    %v320 = vld [vmem:[#allocation2 + $0x60] sm:$0xff]
    %v321 = vld [vmem:[#allocation2 + $0x68] sm:$0xff]
    %v323 = vsel %vm41, %v317, 0
    %325 = vmatprep.subr.mxu0 0.0
    %326 = vmatpush1.msra.mxu0 0.0
    %327 = vmatprep.subr.mxu0 0.0
    %328 = vmatpush1.msra.mxu0 0.0
    %329 = vmatprep.subr.mxu0 0.0
    %330 = vmatpush1.msra.mxu0 0.0
    %331 = vmatprep.subr.mxu0 0.0
    %332 = vmatpush1.msra.mxu0 0.0
    %333 = vmatprep.subr.mxu0 0.0
    %334 = vmatpush1.msra.mxu0 0.0
    %335 = vmatprep.subr.mxu0 0.0
    %336 = vmatpush1.msra.mxu0 0.0
    %337 = vmatprep.subr.mxu0 0.0
    %338 = vmatpush1.msra.mxu0 0.0
    %339 = vmatprep.subr.mxu0 0.0
    %340 = vmatpush1.msra.mxu0 0.0
    %341 = vmatprep.subr.mxu0 0.0
    %342 = vmatpush1.msra.mxu0 0.0
    %343 = vmatprep.subr.mxu0 0.0
    %344 = vmatpush1.msra.mxu0 0.0
    %345 = vmatprep.subr.mxu0 0.0
    %346 = vmatpush1.msra.mxu0 0.0
    %347 = vmatprep.subr.mxu0 0.0
    %348 = vmatpush1.msra.mxu0 0.0
    %349 = vmatprep.subr.mxu0 0.0
    %350 = vmatpush1.msra.mxu0 %v321
    %351 = vmatprep.subr.mxu0 0.0
    %352 = vmatpush1.msra.mxu0 %v320
    %353 = vmatprep.subr.mxu0 0.0
    %354 = vmatpush1.msra.mxu0 %v319
    %355 = vmatprep.subr.mxu0 0.0
    %356 = vmatpush1.msra.mxu0 %v318
    %357 = vmatprep.subr.mxu0 0.0
    %358 = vmatpush2.msra.mxu0 0.0
    %359 = vmatprep.subr.mxu0 0.0
    %360 = vmatpush2.msra.mxu0 0.0
    %361 = vmatprep.subr.mxu0 0.0
    %362 = vmatpush2.msra.mxu0 0.0
    %363 = vmatprep.subr.mxu0 0.0
    %364 = vmatpush2.msra.mxu0 0.0
    %365 = vmatprep.subr.mxu0 0.0
    %366 = vmatpush2.msra.mxu0 0.0
    %367 = vmatprep.subr.mxu0 0.0
    %368 = vmatpush2.msra.mxu0 0.0
    %369 = vmatprep.subr.mxu0 0.0
    %370 = vmatpush2.msra.mxu0 0.0
    %371 = vmatprep.subr.mxu0 0.0
    %372 = vmatpush2.msra.mxu0 0.0
    %373 = vmatprep.subr.mxu0 0.0
    %374 = vmatpush2.msra.mxu0 0.0
    %375 = vmatprep.subr.mxu0 0.0
    %376 = vmatpush2.msra.mxu0 0.0
    %377 = vmatprep.subr.mxu0 0.0
    %378 = vmatpush2.msra.mxu0 0.0
    %379 = vmatprep.subr.mxu0 0.0
    %380 = vmatpush2.msra.mxu0 0.0
    %381 = vmatprep.subr.mxu0 0.0
    %382 = vmatpush2.msra.mxu0 0.0
    %383 = vmatprep.subr.mxu0 0.0
    %384 = vmatpush2.msra.mxu0 0.0
    %385 = vmatprep.subr.mxu0 0.0
    %386 = vmatpush2.msra.mxu0 0.0
    %387 = vmatprep.subr.mxu0 0.0
    %388 = vmatpush2.msra.mxu0 0.0
    %389 = vmatprep.mubr.f32.mxu0 0.0
    %390 = vmatmul.mubr.f32.gmra.mxu0 %v323
    %v391 = vpop.f32.mrf.mxu0
    %v392 = vadd.f32 0.0, %v391
    %v393 = vpop.f32.mrf.mxu0
    %394 = vdwg.mxu0
    %395 = vrot.lane.b32.xlu0 %v317, 96
    %v396 = vpop.permute.xlu0 %395
    %v398 = vmul.f32 %v392, %v396
    %v399 = vld [vmem:[#allocation2 + $0x70] sm:$0xff]
    %v400 = vld [vmem:[#allocation2 + $0x78] sm:$0xff]
    %v401 = vld [vmem:[#allocation2 + $0x80] sm:$0xff]
    %v402 = vld [vmem:[#allocation2 + $0x88] sm:$0xff]
    %v403 = vld [vmem:[#allocation2 + $0x90] sm:$0xff]
    %v404 = vld [vmem:[#allocation2 + $0x98] sm:$0xff]
    %v405 = vld [vmem:[#allocation2 + $0xa0] sm:$0xff]
    %v406 = vld [vmem:[#allocation2 + $0xa8] sm:$0xff]
    %v407 = vld [vmem:[#allocation2 + $0xb2] sm:$0x1]
    %v408 = vlaneseq
    %v409 = vshrl.u32 %v408, 7
    %v410 = vsub.s32 0, %v409
    %v411 = vrot.slane %v407, %v410
    %vm412 = vcmask 523264
    %v414 = vsel %vm412, %v398, 0
    %416 = vmatprep.subr.mxu0 0.0
    %417 = vmatpush1.msra.mxu0 0.0
    %418 = vmatprep.subr.mxu0 0.0
    %419 = vmatpush1.msra.mxu0 0.0
    %420 = vmatprep.subr.mxu0 0.0
    %421 = vmatpush1.msra.mxu0 0.0
    %422 = vmatprep.subr.mxu0 0.0
    %423 = vmatpush1.msra.mxu0 0.0
    %424 = vmatprep.subr.mxu0 0.0
    %425 = vmatpush1.msra.mxu0 0.0
    %426 = vmatprep.subr.mxu0 0.0
    %427 = vmatpush1.msra.mxu0 0.0
    %428 = vmatprep.subr.mxu0 0.0
    %429 = vmatpush1.msra.mxu0 0.0
    %430 = vmatprep.subr.mxu0 0.0
    %431 = vmatpush1.msra.mxu0 0.0
    %432 = vmatprep.subr.mxu0 0.0
    %433 = vmatpush1.msra.mxu0 %v406
    %434 = vmatprep.subr.mxu0 0.0
    %435 = vmatpush1.msra.mxu0 %v405
    %436 = vmatprep.subr.mxu0 0.0
    %437 = vmatpush1.msra.mxu0 %v404
    %438 = vmatprep.subr.mxu0 0.0
    %439 = vmatpush1.msra.mxu0 %v403
    %440 = vmatprep.subr.mxu0 0.0
    %441 = vmatpush1.msra.mxu0 %v402
    %442 = vmatprep.subr.mxu0 0.0
    %443 = vmatpush1.msra.mxu0 %v401
    %444 = vmatprep.subr.mxu0 0.0
    %445 = vmatpush1.msra.mxu0 %v400
    %446 = vmatprep.subr.mxu0 0.0
    %447 = vmatpush1.msra.mxu0 %v399
    %448 = vmatprep.subr.mxu0 0.0
    %449 = vmatpush2.msra.mxu0 0.0
    %450 = vmatprep.subr.mxu0 0.0
    %451 = vmatpush2.msra.mxu0 0.0
    %452 = vmatprep.subr.mxu0 0.0
    %453 = vmatpush2.msra.mxu0 0.0
    %454 = vmatprep.subr.mxu0 0.0
    %455 = vmatpush2.msra.mxu0 0.0
    %456 = vmatprep.subr.mxu0 0.0
    %457 = vmatpush2.msra.mxu0 0.0
    %458 = vmatprep.subr.mxu0 0.0
    %459 = vmatpush2.msra.mxu0 0.0
    %460 = vmatprep.subr.mxu0 0.0
    %461 = vmatpush2.msra.mxu0 0.0
    %462 = vmatprep.subr.mxu0 0.0
    %463 = vmatpush2.msra.mxu0 0.0
    %464 = vmatprep.subr.mxu0 0.0
    %465 = vmatpush2.msra.mxu0 0.0
    %466 = vmatprep.subr.mxu0 0.0
    %467 = vmatpush2.msra.mxu0 0.0
    %468 = vmatprep.subr.mxu0 0.0
    %469 = vmatpush2.msra.mxu0 0.0
    %470 = vmatprep.subr.mxu0 0.0
    %471 = vmatpush2.msra.mxu0 0.0
    %472 = vmatprep.subr.mxu0 0.0
    %473 = vmatpush2.msra.mxu0 0.0
    %474 = vmatprep.subr.mxu0 0.0
    %475 = vmatpush2.msra.mxu0 0.0
    %476 = vmatprep.subr.mxu0 0.0
    %477 = vmatpush2.msra.mxu0 0.0
    %478 = vmatprep.subr.mxu0 0.0
    %479 = vmatpush2.msra.mxu0 0.0
    %480 = vmatprep.mubr.f32.mxu0 0.0
    %481 = vmatmul.mubr.f32.gmra.mxu0 %v414
    %v482 = vpop.f32.mrf.mxu0
    %v483 = vadd.f32 %v411, %v482
    %v484 = vpop.f32.mrf.mxu0
    %485 = vdwg.mxu0
    %486 = vmax.xlane.f32.xlu0 %v483
    %v487 = vpop.xlane.xlu0 %486
    %v488 = vsub.f32 %v483, %v487
    %v489 = vmul.f32 %v488, 1.442695
    %v490 = vpow.pop %v489
    %491 = vadd.xlane.f32.xlu0 %v490
    %v492 = vpop.xlane.xlu0 %491
    %v493 = vlog2.pop %v492
    %v494 = vmul.f32 %v493, 0.6931472
    %v495 = vsub.f32 %v488, %v494
    %496 = vst [vmem:[%s4] sm:$0xff] %v495
    %497 = vst [vmem:[%s4 + $0x8] sm:$0x3] %v126
    // Predicated region
    $region22: #{_fused_forward.1} parent=1 // pred_check
      _
    $region23: #{_fused_forward.1} parent=1 // pred_check_branch
      %499 = sbr.rel (0) target = $region25
    $region24: #{_fused_forward.1} parent=1 // pred_region
      _
    $region25: #{_fused_forward.1} parent=1 // pred_fallthru
      _
    // Predicated region
    $region26: #{_fused_forward.1} parent=1 // pred_check
      _
    $region27: #{_fused_forward.1} parent=1 // pred_check_branch
      %501 = sbr.rel (0) target = $region29
    $region28: #{_fused_forward.1} parent=1 // pred_region
      _
    $region29: #{_fused_forward.1} parent=1 // pred_fallthru
      _
    %502 = vsyncpa [#allocation3], 1

</llo_original>
